<compile_context>
chip_gen: v5e
topology: v5e:2x2
jax: 0.10.0
libtpu: 0.0.40
codegen_flags: <defaults>
</compile_context>

<pallas_src>
import functools

import jax
import jax.numpy as jnp
from jax import lax
from jax.experimental import pallas as pl
from jax.experimental.pallas import tpu as pltpu


def _maxpool_kernel(x_ref, o_ref, *, k):
    """x_ref: (TB, H, W) VMEM block; o_ref: (TB, OH, OW) VMEM block.

    MaxPool2d with stride == kernel_size == k, no padding, floor mode.
    Only value-level ops (dense load, static slices, window-split reshapes,
    jnp.max reductions, one slab store) -- no strided ref indexing.
    """
    tb, oh, ow = o_ref.shape
    w = x_ref.shape[2]

    xv = x_ref[...]                                                   # (TB, H, W)

    # H pooling: trim to the OH*k rows that feed valid outputs (floor mode),
    # split rows into (OH, k) windows and reduce the window axis (VPU maxima).
    hm = jnp.max(xv[:, : oh * k, :].reshape(tb, oh, k, w), axis=2)    # (TB, OH, W)

    # W pooling: trim to OW*k columns, split into (OW, k), reduce the window axis.
    wm = jnp.max(hm[:, :, : ow * k].reshape(tb, oh, ow, k), axis=3)   # (TB, OH, OW)

    # Single dense slab store for the whole block.
    o_ref[...] = wm


def _ceil_div(a, b):
    return -(-a // b)


def _round_up(a, m):
    return _ceil_div(a, m) * m


def _pick_batch_tile(nc, h, w, oh, ow, itemsize,
                     block_budget_bytes=3 * 1024 * 1024, min_programs=8):
    """Pick the N*C tile size.

    Budgets *layout-padded* VMEM (sublane pad 8, lane pad 128) for one in+out
    block; the pipeline holds ~2x input + 2x output blocks plus reshape
    temporaries, so a 3 MiB per-block budget stays well inside the 32 MiB
    vmem_limit on every generation (v5e/v6e/v7x).  Also keeps the grid at
    >= min_programs steps when the problem allows, so both v7x TensorCores get
    work and DMA is hidden behind compute.
    """
    per_in = _round_up(h, 8) * _round_up(w, 128) * itemsize
    per_out = _round_up(oh, 8) * _round_up(ow, 128) * itemsize
    per_slab = per_in + per_out
    tb_budget = max(1, block_budget_bytes // max(per_slab, 1))
    tb_parallel = max(1, nc // min_programs)
    return max(1, min(nc, tb_budget, tb_parallel))


def maxpool2d(x_nchw, kernel_size=3):
    """torch.nn.MaxPool2d(kernel_size) equivalent (stride=kernel_size, no padding,
    floor mode) on an NCHW tensor, computed with a Pallas TPU kernel."""
    n, c, h, w = x_nchw.shape
    k = kernel_size
    if h < k or w < k:
        raise ValueError("spatial dims must be >= kernel_size")
    oh = (h - k) // k + 1
    ow = (w - k) // k + 1
    itemsize = jnp.dtype(x_nchw.dtype).itemsize

    # Fold N and C into one leading dim -- free, metadata-only reshape that keeps
    # the native NCHW layout (no HBM transpose passes in or out).
    nc = n * c
    x3 = x_nchw.reshape(nc, h, w)

    tb = _pick_batch_tile(nc, h, w, oh, ow, itemsize)
    grid = (_ceil_div(nc, tb),)   # cdiv: partial last block is clipped on write

    out3 = pl.pallas_call(
        functools.partial(_maxpool_kernel, k=k),
        out_shape=jax.ShapeDtypeStruct((nc, oh, ow), x_nchw.dtype),
        grid=grid,
        # Full (H, W) extents per block (last two block dims == array dims),
        # tiled along the folded N*C dim only -> dense, unstrided DMAs.
        in_specs=[pl.BlockSpec((tb, h, w), lambda b: (b, 0, 0))],
        out_specs=pl.BlockSpec((tb, oh, ow), lambda b: (b, 0, 0)),
        compiler_params=pltpu.CompilerParams(
            dimension_semantics=("parallel",),
            vmem_limit_bytes=32 * 1024 * 1024,
        ),
        cost_estimate=pl.CostEstimate(
            flops=(k * k - 1) * nc * oh * ow,   # max = compares, no MACs
            transcendentals=0,
            bytes_accessed=(nc * h * w + nc * oh * ow) * itemsize,
        ),
    )(x3)

    # Free reshape back to NCHW output.
    return out3.reshape(n, c, oh, ow)


class PoolingModel:
    """JAX/Pallas port of the PyTorch PoolingModel: forward(x) = MaxPool2d(3)(x)."""

    def __init__(self, kernel_size=3):
        self.kernel_size = kernel_size  # MaxPool2d has no learnable parameters

    def __call__(self, x):
        return maxpool2d(x, self.kernel_size)


if __name__ == "__main__":
    key = jax.random.PRNGKey(0)
    x = jax.random.normal(key, (2, 4, 16, 16), dtype=jnp.float32)  # NCHW like PyTorch

    model = PoolingModel()
    y = jax.block_until_ready(model(x))

    # Reference: XLA reduce_window has identical semantics to nn.MaxPool2d(3).
    ref = lax.reduce_window(
        x, -jnp.inf, lax.max,
        window_dimensions=(1, 1, 3, 3),
        window_strides=(1, 1, 3, 3),
        padding="VALID",
    )
    assert y.shape == (2, 4, 5, 5), y.shape
    assert jnp.allclose(y, ref), "Pallas maxpool mismatch vs reference"
    print("KERNEL_OK")
</pallas_src>

<mosaic_0001>
module attributes {stable_mosaic.version = 11 : i64} {
  func.func @_maxpool_kernel(%arg0: i32, %arg1: memref<1x16x16xf32, #tpu.memory_space<vmem>>, %arg2: memref<1x5x5xf32, #tpu.memory_space<vmem>>) attributes {dimension_semantics = [#tpu.dimension_semantics<parallel>], iteration_bounds = array<i64: 8>, scalar_prefetch = 0 : i64, scratch_operands = 0 : i64, tpu.core_type = #tpu.core_type<tc>, window_params = [{transform_indices = @transform_0, window_bounds = array<i64: 1, 16, 16>}, {transform_indices = @transform_1, window_bounds = array<i64: 1, 5, 5>}]} {
    %c0 = arith.constant 0 : index
    %c0_0 = arith.constant 0 : index
    %c0_1 = arith.constant 0 : index
    %0 = vector.load %arg1[%c0, %c0_0, %c0_1] : memref<1x16x16xf32, #tpu.memory_space<vmem>>, vector<1x16x16xf32>
    %1 = vector.extract_strided_slice %0 {offsets = [0, 0, 0], sizes = [1, 15, 16], strides = [1, 1, 1]} : vector<1x16x16xf32> to vector<1x15x16xf32>
    %2 = vector.shape_cast %1 : vector<1x15x16xf32> to vector<1x5x3x16xf32>
    %cst = arith.constant dense<0xFF800000> : vector<1x5x16xf32>
    %3 = vector.multi_reduction <maximumf>, %2, %cst [2] : vector<1x5x3x16xf32> to vector<1x5x16xf32>
    %4 = vector.extract_strided_slice %3 {offsets = [0, 0, 0], sizes = [1, 5, 15], strides = [1, 1, 1]} : vector<1x5x16xf32> to vector<1x5x15xf32>
    %5 = vector.shape_cast %4 : vector<1x5x15xf32> to vector<1x5x5x3xf32>
    %cst_2 = arith.constant dense<0xFF800000> : vector<1x5x5xf32>
    %6 = vector.multi_reduction <maximumf>, %5, %cst_2 [3] : vector<1x5x5x3xf32> to vector<1x5x5xf32>
    %c0_3 = arith.constant 0 : index
    %c0_4 = arith.constant 0 : index
    %c0_5 = arith.constant 0 : index
    %7 = vector.load %arg2[%c0_3, %c0_4, %c0_5] : memref<1x5x5xf32, #tpu.memory_space<vmem>>, vector<1x5x5xf32>
    tpu.vector_store %arg2[%c0_3, %c0_4, %c0_5], %6 {strides = array<i32>} : memref<1x5x5xf32, #tpu.memory_space<vmem>>, vector<1x5x5xf32>,
    return
  }
  func.func @transform_0(%arg0: i32) -> (i32, i32, i32) {
    %c0_i32 = arith.constant 0 : i32
    %c0_i32_0 = arith.constant 0 : i32
    %c0_i32_1 = arith.constant 0 : i32
    return %arg0, %c0_i32, %c0_i32_0 : i32, i32, i32
  }
  func.func @transform_1(%arg0: i32) -> (i32, i32, i32) {
    %c0_i32 = arith.constant 0 : i32
    %c0_i32_0 = arith.constant 0 : i32
    %c0_i32_1 = arith.constant 0 : i32
    return %arg0, %c0_i32, %c0_i32_0 : i32, i32, i32
  }
}

</mosaic_0001>

<llo_original>
// kernel: tpu_custom_call.1
$region0: #{tpu_custom_call.1}
  #allocation0 [shape = 'u32[]', space=smem, size = 0x4, offset = 0x4, fixed_abs, tag = 'smem constant byte address 0x4 - core index']
  #allocation1 [shape = 'u32[72,128]{1,0:T(1,128)}', space=vmem, size = 0x9000, scoped, tag = 'internal scratch']
  %s0 = inlined_call_operand.hbm [shape: f32[8,16,16], index: 0, kind: input, shape index: {}]
  %s1 = inlined_call_operand.vmem [shape: f32[8,5,5], index: 1, kind: output, shape index: {}]
  %s2 = sld [smem:[#allocation0]]
  $region41: #{tpu_custom_call.1} parent=0
    _
  %s4 = ssub.s32 1, %s2
  %s5 = scalar_select 0, %s4, %s2
  $region1: #{tpu_custom_call.1} parent=0
    #allocation2 [shape = 'u8[16384]{0}', space=vmem, size = 0x4000, scoped, tag = 'input window, operand 0']
    #allocation3 [shape = 's32[2]{0}', space=sflag, size = 0x8, scoped, tag = 'scoped memory for tpu_custom_call.1']
    %6 = vsyncpa [#allocation3], 0
    %s7 = scalar_lea.sflag [#allocation3], 1
    %8 = vsyncpa %s7, 0
    loop: start=0, step=1, limit=10
    $region2: #{tpu_custom_call.1} parent=1 // loop_pre_header
      _
    $region3: #{tpu_custom_call.1} parent=1 // loop_header
      %s10 = sphi 0, %s14
      %p11 = scmp.ge.s32.totalorder %s10, 10
      %s20 = sphi 0, %s22
      %s23 = sphi 0, %s20
      %s24 = sphi 0, %s23
      %s40 = sphi 0, %s24
      %s46 = sphi 0, %s48
      %s49 = sphi 0, %s46
      %s50 = sphi 0, %s49
      %s66 = sphi 0, %s50
    $region4: #{tpu_custom_call.1} parent=1 // loop_header_branch
      %13 = sbr.rel (%p11) target = $region8
    $region5: #{tpu_custom_call.1} parent=1 // loop_body
      %s15 = ssub.s32 %s10, 1
      %s16 = ssub.s32 %s10, 2
      %s17 = sadd.s32 %s10, 1
      %s18 = ssub.s32 %s10, %s17
      %p19 = scmp.eq.s32.totalorder %s18, 0
      %s21 = sadd.s32 %s20, 1
      %s22 = scalar_select %p19, %s20, %s21
      %p25 = pneg %p19
      %p26 = scmp.eq.s32.totalorder %s10, 7
      %p27 = por %p25, %p26
      %p28 = scmp.ne.s32.totalorder %s20, %s23
      %p29 = scmp.eq.s32.totalorder %s10, 0
      %p30 = por %p28, %p29
      %p31 = scmp.ne.s32.totalorder %s20, %s23
      %p32 = scmp.eq.s32.totalorder %s15, 7
      %p33 = por %p31, %p32
      %p34 = scmp.ne.s32.totalorder %s23, %s24
      %p35 = scmp.eq.s32.totalorder %s15, 0
      %p36 = por %p34, %p35
      %p37 = scmp.ne.s32.totalorder %s23, %s24
      %p38 = scmp.eq.s32.totalorder %s16, 7
      %p39 = por %p37, %p38
      %p41 = scmp.ne.s32.totalorder %s24, %s40
      %p42 = scmp.eq.s32.totalorder %s16, 0
      %p43 = por %p41, %p42
      %s44 = ssub.s32 %s10, %s17
      %p45 = scmp.eq.s32.totalorder %s44, 0
      %s47 = sadd.s32 %s46, 1
      %s48 = scalar_select %p45, %s46, %s47
      %p51 = pneg %p45
      %p52 = scmp.eq.s32.totalorder %s10, 7
      %p53 = por %p51, %p52
      %p54 = scmp.ne.s32.totalorder %s46, %s49
      %p55 = scmp.eq.s32.totalorder %s10, 0
      %p56 = por %p54, %p55
      %p57 = scmp.ne.s32.totalorder %s46, %s49
      %p58 = scmp.eq.s32.totalorder %s15, 7
      %p59 = por %p57, %p58
      %p60 = scmp.ne.s32.totalorder %s49, %s50
      %p61 = scmp.eq.s32.totalorder %s15, 0
      %p62 = por %p60, %p61
      %p63 = scmp.ne.s32.totalorder %s49, %s50
      %p64 = scmp.eq.s32.totalorder %s16, 7
      %p65 = por %p63, %p64
      %p67 = scmp.ne.s32.totalorder %s50, %s66
      %p68 = scmp.eq.s32.totalorder %s16, 0
      %p69 = por %p67, %p68
      %p70 = scmp.le.s32.totalorder 1, %s10
      %p71 = scmp.lt.s32.totalorder %s10, 9
      %p72 = pnand %p70, %p71
      %p73 = pneg %p72
      // Predicated region
      $region9: #{tpu_custom_call.1} parent=5 // pred_check
        _
      $region10: #{tpu_custom_call.1} parent=5 // pred_check_branch
        %75 = sbr.rel (%p72) target = $region12
      $region11: #{tpu_custom_call.1} parent=5 // pred_region
        %s76 = ssub.s32 %s10, 1
      $region12: #{tpu_custom_call.1} parent=5 // pred_fallthru
        _
      %p77 = scmp.lt.s32.totalorder %s10, 8
      // Predicated region
      $region13: #{tpu_custom_call.1} parent=5 // pred_check
        %p78 = pneg %p77
      $region14: #{tpu_custom_call.1} parent=5 // pred_check_branch
        %80 = sbr.rel (%p78) target = $region16
      $region15: #{tpu_custom_call.1} parent=5 // pred_region
        // Predicated region
        $region17: #{tpu_custom_call.1} parent=15 // pred_check
          %p81 = pneg %p30
        $region18: #{tpu_custom_call.1} parent=15 // pred_check_branch
          %83 = sbr.rel (%p81) target = $region20
        $region19: #{tpu_custom_call.1} parent=15 // pred_region
          %s84 = sand.u32 %s20, 1
          %s85 = scalar_lea.sflag [#allocation3], %s84
          %s86 = sand.u32 %s20, 1
          %s87 = smul.addr %s86, 16
          %s88 = scalar_lea.vmem [#allocation2], %s87
          %90 = vsyncadd %s85, 0
          %s91 = smul.addr %s10, 2
          %s92 = smul.addr %s91, 8
          %s93 = scalar_lea.hbm %s0, %s92
          %s94 = sshll.u32 %s93, 4
          %s95 = int_to_ptr.hbm [resolvable:$true] %s94
          %s96 = sshll.u32 %s88, 4
          %s97 = int_to_ptr.vmem [resolvable:$true] %s96
          %102 = dma.hbm_to_vmem [thread:$0]  %s95, 256, %s97, %s85, 128, 128, 8
        $region20: #{tpu_custom_call.1} parent=15 // pred_fallthru
          _
      $region16: #{tpu_custom_call.1} parent=5 // pred_fallthru
        _
      %p103 = scmp.le.s32.totalorder 1, %s10
      %p104 = scmp.lt.s32.totalorder %s10, 9
      %p105 = pnand %p103, %p104
      %p106 = pneg %p105
      // Predicated region
      $region21: #{tpu_custom_call.1} parent=5 // pred_check
        _
      $region22: #{tpu_custom_call.1} parent=5 // pred_check_branch
        %108 = sbr.rel (%p105) target = $region24
      $region23: #{tpu_custom_call.1} parent=5 // pred_region
        %s109 = ssub.s32 %s10, 1
        %s110 = sand.u32 %s23, 1
        %s111 = scalar_lea.sflag [#allocation3], %s110
        %s112 = sand.u32 %s23, 1
        %s113 = smul.addr %s112, 16
        %s114 = scalar_lea.vmem [#allocation2], %s113
        // Predicated region
        $region25: #{tpu_custom_call.1} parent=23 // pred_check
          %p115 = pneg %p36
        $region26: #{tpu_custom_call.1} parent=23 // pred_check_branch
          %117 = sbr.rel (%p115) target = $region28
        $region27: #{tpu_custom_call.1} parent=23 // pred_region
          %119 = dma.done %s111, 256
        $region28: #{tpu_custom_call.1} parent=23 // pred_fallthru
          _
        %s120 = sand.u32 %s23, 1
        %s121 = scalar_lea.sflag [#allocation3], %s120
        %s122 = sand.u32 %s23, 1
        %s123 = smul.addr %s122, 16
        %s124 = scalar_lea.vmem [#allocation2], %s123
        %p125 = pneg %p36
        %p126 = pneg %p33
        %p127 = pneg %p62
        %p128 = pneg %p59
        %p129 = scmp.lt.s32.totalorder %s15, 7
        %s130 = scalar_select %p129, %s15, 7
        %s131 = smul.addr %s130, 8
        %s132 = scalar_lea.vmem %s1, %s131
        %p133 = scmp.lt.s32.totalorder %s15, 7
        %s134 = scalar_select %p133, %s15, 7
        %s135 = smul.addr %s134, 8
        %s136 = scalar_lea.vmem %s1, %s135
        %v137 = vld [vmem:[%s114] sm:$0xff]
        %v138 = vld [vmem:[%s114 + $0x8] sm:$0xff]
        %v141 = vrot.slane %v137, 1
        %v142 = vrot.slane %v137, 2
        %v143 = vrot.slane %v137, 3
        %v144 = vrot.slane %v137, 4
        %v145 = vrot.slane %v137, 5
        %v146 = vrot.slane %v137, 6
        %v147 = vrot.slane %v137, 7
        %v148 = vrot.slane %v138, 1
        %v149 = vrot.slane %v138, 2
        %v150 = vrot.slane %v138, 3
        %v151 = vrot.slane %v138, 4
        %v152 = vrot.slane %v138, 5
        %v153 = vrot.slane %v138, 6
        %154 = vst [vmem:[#allocation1] ss:$9 sm:$0xff] %v137
        %s155 = scalar_lea.vmem [#allocation1], 1
        %156 = vst [vmem:[%s155] ss:$9 sm:$0xff] %v141
        %s157 = scalar_lea.vmem [#allocation1], 2
        %158 = vst [vmem:[%s157] ss:$9 sm:$0xff] %v142
        %v159 = vld [vmem:[#allocation1] sm:$0xff]
        %160 = vst [vmem:[#allocation1] ss:$9 sm:$0xff] %v143
        %161 = vst [vmem:[%s155] ss:$9 sm:$0xff] %v144
        %162 = vst [vmem:[%s157] ss:$9 sm:$0xff] %v145
        %v163 = vld [vmem:[#allocation1] sm:$0xff]
        %164 = vst [vmem:[#allocation1] ss:$9 sm:$0xff] %v146
        %165 = vst [vmem:[%s155] ss:$9 sm:$0xff] %v147
        %166 = vst [vmem:[%s157] ss:$9 sm:$0xff] %v138
        %v167 = vld [vmem:[#allocation1] sm:$0xff]
        %168 = vst [vmem:[#allocation1] ss:$9 sm:$0xff] %v148
        %169 = vst [vmem:[%s155] ss:$9 sm:$0xff] %v149
        %170 = vst [vmem:[%s157] ss:$9 sm:$0xff] %v150
        %v171 = vld [vmem:[#allocation1] sm:$0xff]
        %172 = vst [vmem:[#allocation1] ss:$9 sm:$0xff] %v151
        %173 = vst [vmem:[%s155] ss:$9 sm:$0xff] %v152
        %174 = vst [vmem:[%s157] ss:$9 sm:$0xff] %v153
        %v175 = vld [vmem:[#allocation1] sm:$0xff]
        %vm181 = vcmask 124928
        %v182 = vsel %vm181, %v159, -inf
        %v183 = vrot.slane %v182, 4
        %v184 = vmax.f32 %v182, %v183
        %v185 = vrot.slane %v184, 2
        %v186 = vmax.f32 %v184, %v185
        %v187 = vrot.slane %v186, 1
        %v188 = vmax.f32 %v186, %v187
        %v189 = vsel %vm181, %v163, -inf
        %v190 = vrot.slane %v189, 4
        %v191 = vmax.f32 %v189, %v190
        %v192 = vrot.slane %v191, 2
        %v193 = vmax.f32 %v191, %v192
        %v194 = vrot.slane %v193, 1
        %v195 = vmax.f32 %v193, %v194
        %v196 = vsel %vm181, %v167, -inf
        %v197 = vrot.slane %v196, 4
        %v198 = vmax.f32 %v196, %v197
        %v199 = vrot.slane %v198, 2
        %v200 = vmax.f32 %v198, %v199
        %v201 = vrot.slane %v200, 1
        %v202 = vmax.f32 %v200, %v201
        %v203 = vsel %vm181, %v171, -inf
        %v204 = vrot.slane %v203, 4
        %v205 = vmax.f32 %v203, %v204
        %v206 = vrot.slane %v205, 2
        %v207 = vmax.f32 %v205, %v206
        %v208 = vrot.slane %v207, 1
        %v209 = vmax.f32 %v207, %v208
        %v210 = vsel %vm181, %v175, -inf
        %v211 = vrot.slane %v210, 4
        %v212 = vmax.f32 %v210, %v211
        %v213 = vrot.slane %v212, 2
        %v214 = vmax.f32 %v212, %v213
        %v215 = vrot.slane %v214, 1
        %v216 = vmax.f32 %v214, %v215
        %222 = vrot.lane.b32.xlu0 %v188, 125
        %v223 = vpop.permute.xlu0 %222
        %224 = vrot.lane.b32.xlu0 %v195, 125
        %v225 = vpop.permute.xlu0 %224
        %226 = vrot.lane.b32.xlu0 %v202, 125
        %v227 = vpop.permute.xlu0 %226
        %228 = vrot.lane.b32.xlu0 %v209, 125
        %v229 = vpop.permute.xlu0 %228
        %230 = vrot.lane.b32.xlu0 %v216, 125
        %v231 = vpop.permute.xlu0 %230
        %232 = vrot.lane.b32.xlu0 %v188, 122
        %v233 = vpop.permute.xlu0 %232
        %234 = vrot.lane.b32.xlu0 %v195, 122
        %v235 = vpop.permute.xlu0 %234
        %236 = vrot.lane.b32.xlu0 %v202, 122
        %v237 = vpop.permute.xlu0 %236
        %238 = vrot.lane.b32.xlu0 %v209, 122
        %v239 = vpop.permute.xlu0 %238
        %240 = vrot.lane.b32.xlu0 %v216, 122
        %v241 = vpop.permute.xlu0 %240
        %242 = vrot.lane.b32.xlu0 %v188, 119
        %v243 = vpop.permute.xlu0 %242
        %244 = vrot.lane.b32.xlu0 %v195, 119
        %v245 = vpop.permute.xlu0 %244
        %246 = vrot.lane.b32.xlu0 %v202, 119
        %v247 = vpop.permute.xlu0 %246
        %248 = vrot.lane.b32.xlu0 %v209, 119
        %v249 = vpop.permute.xlu0 %248
        %250 = vrot.lane.b32.xlu0 %v216, 119
        %v251 = vpop.permute.xlu0 %250
        %252 = vrot.lane.b32.xlu0 %v188, 116
        %v253 = vpop.permute.xlu0 %252
        %254 = vrot.lane.b32.xlu0 %v195, 116
        %v255 = vpop.permute.xlu0 %254
        %256 = vrot.lane.b32.xlu0 %v202, 116
        %v257 = vpop.permute.xlu0 %256
        %258 = vrot.lane.b32.xlu0 %v209, 116
        %v259 = vpop.permute.xlu0 %258
        %260 = vrot.lane.b32.xlu0 %v216, 116
        %v261 = vpop.permute.xlu0 %260
        %v262 = vrot.slane %v195, 7
        %vm263 = vcmask 1041409
        %v264 = vsel %vm263, %v262, %v188
        %v265 = vrot.slane %v202, 6
        %vm266 = vcmask 1042434
        %v267 = vsel %vm266, %v265, %v264
        %v268 = vrot.slane %v209, 5
        %vm269 = vcmask 1043459
        %v270 = vsel %vm269, %v268, %v267
        %v271 = vrot.slane %v216, 4
        %vm272 = vcmask 1044484
        %v273 = vsel %vm272, %v271, %v270
        %v274 = vrot.slane %v225, 7
        %v275 = vsel %vm263, %v274, %v223
        %v276 = vrot.slane %v227, 6
        %v277 = vsel %vm266, %v276, %v275
        %v278 = vrot.slane %v229, 5
        %v279 = vsel %vm269, %v278, %v277
        %v280 = vrot.slane %v231, 4
        %v281 = vsel %vm272, %v280, %v279
        %v282 = vrot.slane %v235, 7
        %v283 = vsel %vm263, %v282, %v233
        %v284 = vrot.slane %v237, 6
        %v285 = vsel %vm266, %v284, %v283
        %v286 = vrot.slane %v239, 5
        %v287 = vsel %vm269, %v286, %v285
        %v288 = vrot.slane %v241, 4
        %v289 = vsel %vm272, %v288, %v287
        %v290 = vrot.slane %v245, 7
        %v291 = vsel %vm263, %v290, %v243
        %v292 = vrot.slane %v247, 6
        %v293 = vsel %vm266, %v292, %v291
        %v294 = vrot.slane %v249, 5
        %v295 = vsel %vm269, %v294, %v293
        %v296 = vrot.slane %v251, 4
        %v297 = vsel %vm272, %v296, %v295
        %v298 = vrot.slane %v255, 7
        %v299 = vsel %vm263, %v298, %v253
        %v300 = vrot.slane %v257, 6
        %v301 = vsel %vm266, %v300, %v299
        %v302 = vrot.slane %v259, 5
        %v303 = vsel %vm269, %v302, %v301
        %v304 = vrot.slane %v261, 4
        %v305 = vsel %vm272, %v304, %v303
        %v311 = vrot.slane %v289, 4
        %vm312 = vcmask 1047556
        %v313 = vsel %vm312, %v311, %v273
        %v314 = vrot.slane %v273, 4
        %v315 = vsel %vm312, %v289, %v314
        %v317 = vunpack.c.l.s4 1983009808
        %v318 = vunpack.c.0.s8 %v317
        %v319 = vperm.slane %v313, %v318
        %v321 = vunpack.c.l.s4 1983009808
        %v322 = vunpack.c.0.s8 %v321
        %v323 = vperm.slane %v315, %v322
        %v324 = vrot.slane %v297, 4
        %v325 = vsel %vm312, %v324, %v281
        %v326 = vrot.slane %v281, 4
        %v327 = vsel %vm312, %v297, %v326
        %v329 = vunpack.c.l.s4 1983009808
        %v330 = vunpack.c.0.s8 %v329
        %v331 = vperm.slane %v325, %v330
        %v333 = vunpack.c.l.s4 1983009808
        %v334 = vunpack.c.0.s8 %v333
        %v335 = vperm.slane %v327, %v334
        %v337 = vunpack.c.l.s4 1983009808
        %v338 = vunpack.c.0.s8 %v337
        %v339 = vperm.slane %v305, %v338
        %v340 = vrot.slane %v331, 4
        %v341 = vsel %vm312, %v340, %v319
        %v342 = vrot.slane %v319, 4
        %v343 = vsel %vm312, %v331, %v342
        %v345 = vunpack.c.l.s4 1934713408
        %v346 = vunpack.c.0.s8 %v345
        %v347 = vperm.slane %v341, %v346
        %v349 = vunpack.c.l.s4 1934713408
        %v350 = vunpack.c.0.s8 %v349
        %v351 = vperm.slane %v343, %v350
        %v352 = vrot.slane %v335, 4
        %v353 = vsel %vm312, %v352, %v323
        %v355 = vunpack.c.l.s4 1934713408
        %v356 = vunpack.c.0.s8 %v355
        %v357 = vperm.slane %v353, %v356
        %v358 = vrot.slane %v339, 4
        %v359 = vsel %vm312, 0.0, %v358
        %v361 = vunpack.c.l.s4 1934713408
        %v362 = vunpack.c.0.s8 %v361
        %v363 = vperm.slane %v339, %v362
        %v365 = vunpack.c.l.s4 1934713408
        %v366 = vunpack.c.0.s8 %v365
        %v367 = vperm.slane %v359, %v366
        %v368 = vrot.slane %v305, 4
        %v369 = vsel %vm312, 0.0, %v368
        %v370 = vrot.slane %v363, 4
        %v371 = vsel %vm312, %v370, %v347
        %v372 = vrot.slane %v347, 4
        %v373 = vsel %vm312, %v363, %v372
        %v374 = vrot.slane %v367, 4
        %v375 = vsel %vm312, %v374, %v351
        %v376 = vrot.slane %v351, 4
        %v377 = vsel %vm312, %v367, %v376
        %v378 = vrot.slane %v369, 4
        %v379 = vsel %vm312, %v378, %v357
        %vm380 = vcmask 20480
        %v381 = vsel %vm380, %v371, -inf
        %382 = vmax.xlane.f32.xlu0 %v381
        %v383 = vpop.xlane.xlu0 %382
        %v384 = vsel %vm380, %v373, -inf
        %385 = vmax.xlane.f32.xlu0 %v384
        %v386 = vpop.xlane.xlu0 %385
        %v387 = vsel %vm380, %v375, -inf
        %388 = vmax.xlane.f32.xlu0 %v387
        %v389 = vpop.xlane.xlu0 %388
        %v390 = vsel %vm380, %v377, -inf
        %391 = vmax.xlane.f32.xlu0 %v390
        %v392 = vpop.xlane.xlu0 %391
        %v393 = vsel %vm380, %v379, -inf
        %394 = vmax.xlane.f32.xlu0 %v393
        %v395 = vpop.xlane.xlu0 %394
        %v401 = vlaneseq
        %v402 = vand.u32 %v401, 127
        %v403 = vperm.slane %v383, %v402
        %v404 = vperm.slane %v386, %v402
        %v405 = vperm.slane %v389, %v402
        %v406 = vperm.slane %v392, %v402
        %v407 = vperm.slane %v395, %v402
        %v408 = vsel %vm263, %v404, %v403
        %v409 = vsel %vm266, %v405, %v408
        %v410 = vsel %vm269, %v406, %v409
        %v411 = vsel %vm272, %v407, %v410
        %vm413 = vcmask 36864
        %414 = vst.msk [vmem:[%s136] sm:$0x1f] %vm413, %v411
        %p415 = scmp.lt.s32.totalorder %s15, 7
        %s416 = scalar_select %p415, %s15, 7
        %s417 = smul.addr %s416, 8
        %s418 = scalar_lea.vmem %s1, %s417
        // Predicated region
        $region29: #{tpu_custom_call.1} parent=23 // pred_check
          %p419 = pneg %p59
        $region30: #{tpu_custom_call.1} parent=23 // pred_check_branch
          %421 = sbr.rel (%p419) target = $region32
        $region31: #{tpu_custom_call.1} parent=23 // pred_region
          _
        $region32: #{tpu_custom_call.1} parent=23 // pred_fallthru
          _
      $region24: #{tpu_custom_call.1} parent=5 // pred_fallthru
        _
      %p422 = scmp.le.s32.totalorder 2, %s10
      // Predicated region
      $region33: #{tpu_custom_call.1} parent=5 // pred_check
        %p423 = pneg %p422
      $region34: #{tpu_custom_call.1} parent=5 // pred_check_branch
        %425 = sbr.rel (%p423) target = $region36
      $region35: #{tpu_custom_call.1} parent=5 // pred_region
        %s426 = ssub.s32 %s10, 2
        // Predicated region
        $region37: #{tpu_custom_call.1} parent=35 // pred_check
          %p427 = pneg %p65
        $region38: #{tpu_custom_call.1} parent=35 // pred_check_branch
          %429 = sbr.rel (%p427) target = $region40
        $region39: #{tpu_custom_call.1} parent=35 // pred_region
          %p430 = scmp.lt.s32.totalorder %s16, 7
          %s431 = scalar_select %p430, %s16, 7
          %s432 = smul.addr %s431, 8
          %s433 = scalar_lea.vmem %s1, %s432
        $region40: #{tpu_custom_call.1} parent=35 // pred_fallthru
          _
      $region36: #{tpu_custom_call.1} parent=5 // pred_fallthru
        _
    $region6: #{tpu_custom_call.1} parent=1 // loop_footer
      %s14 = sadd.s32 1, %s10
    $region7: #{tpu_custom_call.1} parent=1 // loop_footer_branch
      %9 = sbr.rel target = $region3
    $region8: #{tpu_custom_call.1} parent=1 // loop_exit
      _
    %434 = vsyncpa [#allocation3], 1
    %s435 = scalar_lea.sflag [#allocation3], 1
    %436 = vsyncpa %s435, 1

</llo_original>
